<compile_context>
chip_gen: v7x
topology: tpu7x:2x2x1
jax: 0.10.0
libtpu: 0.0.40
codegen_flags: <defaults>
</compile_context>

<pallas_src>
import functools

import jax
import jax.numpy as jnp
from jax.experimental import pallas as pl
from jax.experimental.pallas import tpu as pltpu

_FEATURE = 256
_BN_EPS = 1e-5


# ---------------------------------------------------------------------------
# Helpers
# ---------------------------------------------------------------------------
def _round_up(n, m):
    return ((n + m - 1) // m) * m


def _vmem_capacity_bytes():
    """Physical VMEM per core, generation-aware; conservative fallback (v7x)."""
    try:
        cap = int(pltpu.get_tpu_info().vmem_capacity_bytes)
        if cap > 0:
            return cap
    except Exception:
        pass
    return 64 << 20


def _pick_batch_tile(batch, x_dim, feature, budget_bytes):
    """Largest batch tile whose double-buffered per-step working set fits the budget."""
    for t in (2048, 1024, 512, 256, 128, 64, 32, 16, 8):
        if batch < t:
            continue
        per_step = 4 * t * (x_dim + feature)   # x tile + feat tile (f32)
        if 3 * per_step <= budget_bytes:       # 2x buffers + slack
            return t
    return 8


# ---------------------------------------------------------------------------
# Fused kernel: GEMM1 + moments + BN + ReLU + analytic 2-class log_softmax.
# Grid over batch tiles ("arbitrary": sequential moment accumulation in scratch;
# head is evaluated once, on the last step, over the persistent feat scratch).
# ---------------------------------------------------------------------------
def _fused_kernel(x_ref, w1_ref, b1_ref, gamma_ref, beta_ref, dw_ref, db_ref,
                  feat_ref, out_ref, feat_sc, s1_sc, s2_sc,
                  *, batch_size, tile_b, padded):
    i = pl.program_id(0)

    feat = jnp.dot(x_ref[...], w1_ref[...],
                   preferred_element_type=jnp.float32) + b1_ref[...]
    feat_ref[...] = feat.astype(feat_ref.dtype)

    row0 = pl.multiple_of(i * tile_b, tile_b)
    feat_sc[pl.ds(row0, tile_b), :] = feat

    if padded:  # mask zero-padded rows out of the batch statistics
        row = jax.lax.broadcasted_iota(jnp.int32, (tile_b, 1), 0) + i * tile_b
        fm = jnp.where(row < batch_size, feat, 0.0)
    else:
        fm = feat
    s1 = jnp.sum(fm, axis=0, keepdims=True)
    s2 = jnp.sum(fm * fm, axis=0, keepdims=True)

    @pl.when(i == 0)
    def _init():
        s1_sc[...] = s1
        s2_sc[...] = s2

    @pl.when(i != 0)
    def _accum():
        s1_sc[...] = s1_sc[...] + s1
        s2_sc[...] = s2_sc[...] + s2

    @pl.when(i == pl.num_programs(0) - 1)
    def _head():
        inv_b = jnp.float32(1.0 / batch_size)
        mean = s1_sc[...] * inv_b
        var = jnp.maximum(s2_sc[...] * inv_b - mean * mean, 0.0)  # clamp cancellation
        scale = jax.lax.rsqrt(var + _BN_EPS) * gamma_ref[...]
        shift = beta_ref[...] - mean * scale

        h = jnp.maximum(feat_sc[...] * scale + shift, 0.0)        # (B_pad, feature)
        # d = logits[:,1] - logits[:,0]
        d = jnp.sum(h * dw_ref[...], axis=1, keepdims=True) + db_ref[0]
        # log_softmax([l0, l1]) = [-softplus(d), -softplus(-d)], stable softplus.
        sp_pos = jnp.maximum(d, 0.0) + jnp.log(1.0 + jnp.exp(-jnp.abs(d)))
        sp_neg = sp_pos - d
        lane = jax.lax.broadcasted_iota(jnp.int32, out_ref.shape, 1)
        out_ref[...] = jnp.where(lane == 0, -sp_pos, -sp_neg).astype(out_ref.dtype)


# ---------------------------------------------------------------------------
# Two-pass fallback (very large batches): K1 GEMM1 + per-tile partial moments.
# ---------------------------------------------------------------------------
def _feat_partial_kernel(x_ref, w1_ref, b1_ref, feat_ref, p1_ref, p2_ref,
                         *, batch_size, tile_b, padded):
    feat = jnp.dot(x_ref[...], w1_ref[...],
                   preferred_element_type=jnp.float32) + b1_ref[...]
    feat_ref[...] = feat.astype(feat_ref.dtype)

    if padded:
        row = (jax.lax.broadcasted_iota(jnp.int32, (tile_b, 1), 0)
               + pl.program_id(0) * tile_b)
        fm = jnp.where(row < batch_size, feat, 0.0)
    else:
        fm = feat
    p1_ref[...] = jnp.expand_dims(jnp.sum(fm, axis=0, keepdims=True), 0)
    p2_ref[...] = jnp.expand_dims(jnp.sum(fm * fm, axis=0, keepdims=True), 0)


# K2: folded BN (scale/shift precomputed in the wrapper) + ReLU + head.
def _bn_head_kernel(feat_ref, scale_ref, shift_ref, dw_ref, db_ref, out_ref):
    h = jnp.maximum(feat_ref[...] * scale_ref[...] + shift_ref[...], 0.0)
    d = jnp.sum(h * dw_ref[...], axis=1, keepdims=True) + db_ref[0]
    sp_pos = jnp.maximum(d, 0.0) + jnp.log(1.0 + jnp.exp(-jnp.abs(d)))
    sp_neg = sp_pos - d
    lane = jax.lax.broadcasted_iota(jnp.int32, out_ref.shape, 1)
    out_ref[...] = jnp.where(lane == 0, -sp_pos, -sp_neg).astype(out_ref.dtype)


# ---------------------------------------------------------------------------
# Wrapper
# ---------------------------------------------------------------------------
def domain_classifier_forward(x, constant, params, *, force_two_pass=False):
    """x: [B, x_dim] float32.  `constant` is unused in forward (GRL identity)."""
    del constant  # TODO(synk): GRL gradient reversal is backward-only; forward is identity.
    w1, b1, gamma, beta, w2, b2 = params
    B, x_dim = x.shape
    feature = w1.shape[1]
    f32 = jnp.float32

    cap = _vmem_capacity_bytes()
    vmem_cap = (cap * 13) // 16           # ~81% of physical (≈52 MiB v7x, ≈104 MiB v5e/v6e)

    tb = _pick_batch_tile(B, x_dim, feature, vmem_cap // 2)
    num_tiles = int(pl.cdiv(B, tb))
    b_pad = num_tiles * tb
    padded = b_pad != B
    xp = jnp.pad(x, ((0, b_pad - B), (0, 0))) if padded else x

    b1r = b1.reshape(1, feature).astype(f32)
    gammar = gamma.reshape(1, feature).astype(f32)
    betar = beta.reshape(1, feature).astype(f32)
    dw = (w2[:, 1] - w2[:, 0]).reshape(1, feature).astype(f32)
    db = (b2[1] - b2[0]).reshape(1).astype(f32)

    per_step = 4 * tb * (x_dim + feature)
    small_vecs = 6 * 8 * 128 * 4
    resident_fused = (4 * x_dim * feature                 # w1
                      + 4 * b_pad * feature               # feat scratch
                      + 4 * _round_up(b_pad, 8) * 128     # resident (b_pad,2) out (lane-padded)
                      + small_vecs)
    fused_need = 2 * per_step + resident_fused + (4 << 20)
    use_fused = (not force_two_pass) and fused_need <= vmem_cap

    if use_fused:
        vmem_limit = int(min(max(fused_need, 32 << 20), vmem_cap))
        feat_pad, out_pad = pl.pallas_call(
            functools.partial(_fused_kernel, batch_size=B, tile_b=tb, padded=padded),
            out_shape=(
                jax.ShapeDtypeStruct((b_pad, feature), f32),
                jax.ShapeDtypeStruct((b_pad, 2), f32),
            ),
            grid_spec=pltpu.PrefetchScalarGridSpec(
                num_scalar_prefetch=0,
                grid=(num_tiles,),
                in_specs=[
                    pl.BlockSpec((tb, x_dim), lambda i: (i, 0)),
                    pl.BlockSpec((x_dim, feature), lambda i: (0, 0)),   # resident
                    pl.BlockSpec((1, feature), lambda i: (0, 0)),
                    pl.BlockSpec((1, feature), lambda i: (0, 0)),
                    pl.BlockSpec((1, feature), lambda i: (0, 0)),
                    pl.BlockSpec((1, feature), lambda i: (0, 0)),
                    pl.BlockSpec(memory_space=pltpu.MemorySpace.SMEM),  # db scalar
                ],
                out_specs=(
                    pl.BlockSpec((tb, feature), lambda i: (i, 0)),
                    pl.BlockSpec((b_pad, 2), lambda i: (0, 0)),         # resident, one writeback
                ),
                scratch_shapes=[
                    pltpu.VMEM((b_pad, feature), f32),   # persistent feat
                    pltpu.VMEM((1, feature), f32),       # sum
                    pltpu.VMEM((1, feature), f32),       # sum of squares
                ],
            ),
            compiler_params=pltpu.CompilerParams(
                dimension_semantics=("arbitrary",),      # sequential moment accumulation
                vmem_limit_bytes=vmem_limit,
            ),
            cost_estimate=pl.CostEstimate(
                flops=2 * b_pad * x_dim * feature + 14 * b_pad * feature,
                transcendentals=2 * b_pad + feature,
                bytes_accessed=4 * (b_pad * x_dim + x_dim * feature
                                    + b_pad * feature + b_pad * 2 + 6 * feature),
            ),
        )(xp, w1, b1r, gammar, betar, dw, db)
    else:
        # ---- pass 1: GEMM1 + per-tile partial moments ("parallel": megacore OK) ----
        vmem1 = int(min(max(2 * per_step + 4 * x_dim * feature + small_vecs + (4 << 20),
                            32 << 20), vmem_cap))
        x_kw = {"pipeline_mode": pl.Buffered(3)} if num_tiles >= 3 else {}
        feat_pad, p1, p2 = pl.pallas_call(
            functools.partial(_feat_partial_kernel, batch_size=B, tile_b=tb, padded=padded),
            out_shape=(
                jax.ShapeDtypeStruct((b_pad, feature), f32),
                jax.ShapeDtypeStruct((num_tiles, 1, feature), f32),
                jax.ShapeDtypeStruct((num_tiles, 1, feature), f32),
            ),
            grid_spec=pltpu.PrefetchScalarGridSpec(
                num_scalar_prefetch=0,
                grid=(num_tiles,),
                in_specs=[
                    pl.BlockSpec((tb, x_dim), lambda i: (i, 0), **x_kw),
                    pl.BlockSpec((x_dim, feature), lambda i: (0, 0)),
                    pl.BlockSpec((1, feature), lambda i: (0, 0)),
                ],
                out_specs=(
                    pl.BlockSpec((tb, feature), lambda i: (i, 0)),
                    pl.BlockSpec((1, 1, feature), lambda i: (i, 0, 0)),
                    pl.BlockSpec((1, 1, feature), lambda i: (i, 0, 0)),
                ),
            ),
            compiler_params=pltpu.CompilerParams(
                dimension_semantics=("parallel",),
                vmem_limit_bytes=vmem1,
            ),
            cost_estimate=pl.CostEstimate(
                flops=2 * b_pad * x_dim * feature + 4 * b_pad * feature,
                transcendentals=0,
                bytes_accessed=4 * (b_pad * x_dim + x_dim * feature
                                    + b_pad * feature + 2 * num_tiles * feature),
            ),
        )(xp, w1, b1r)

        # Loop-invariant BN fold in the wrapper (tiny XLA op), variance clamped.
        inv_b = jnp.float32(1.0 / B)
        s1 = jnp.sum(p1[:, 0, :], axis=0, keepdims=True)
        s2 = jnp.sum(p2[:, 0, :], axis=0, keepdims=True)
        mean = s1 * inv_b
        var = jnp.maximum(s2 * inv_b - mean * mean, 0.0)
        scale = jax.lax.rsqrt(var + _BN_EPS) * gammar
        shift = betar - mean * scale

        # ---- pass 2: folded BN + ReLU + analytic 2-class log_softmax ----
        vmem2 = int(min(max(2 * 4 * tb * feature + 2 * 4 * tb * 128
                            + small_vecs + (4 << 20), 32 << 20), vmem_cap))
        feat_kw = {"pipeline_mode": pl.Buffered(3)} if num_tiles >= 3 else {}
        out_pad = pl.pallas_call(
            _bn_head_kernel,
            out_shape=jax.ShapeDtypeStruct((b_pad, 2), f32),
            grid_spec=pltpu.PrefetchScalarGridSpec(
                num_scalar_prefetch=0,
                grid=(num_tiles,),
                in_specs=[
                    pl.BlockSpec((tb, feature), lambda i: (i, 0), **feat_kw),
                    pl.BlockSpec((1, feature), lambda i: (0, 0)),
                    pl.BlockSpec((1, feature), lambda i: (0, 0)),
                    pl.BlockSpec((1, feature), lambda i: (0, 0)),
                    pl.BlockSpec(memory_space=pltpu.MemorySpace.SMEM),
                ],
                out_specs=pl.BlockSpec((tb, 2), lambda i: (i, 0)),
            ),
            compiler_params=pltpu.CompilerParams(
                dimension_semantics=("parallel",),
                vmem_limit_bytes=vmem2,
            ),
            cost_estimate=pl.CostEstimate(
                flops=6 * b_pad * feature,
                transcendentals=2 * b_pad,
                bytes_accessed=4 * (b_pad * feature + 3 * feature + b_pad * 2),
            ),
        )(feat_pad, scale, shift, dw, db)

    if padded:
        return out_pad[:B], feat_pad[:B]
    return out_pad, feat_pad


# ---------------------------------------------------------------------------
# Params / reference
# ---------------------------------------------------------------------------
def make_params(key, x_dim, feature=_FEATURE):
    k1, k2, k3, k4 = jax.random.split(key, 4)
    w1 = jax.random.normal(k1, (x_dim, feature), jnp.float32) * 0.05
    b1 = jax.random.normal(k2, (feature,), jnp.float32) * 0.05
    gamma = jnp.ones((feature,), jnp.float32)
    beta = jnp.zeros((feature,), jnp.float32)
    w2 = jax.random.normal(k3, (feature, 2), jnp.float32) * 0.05
    b2 = jax.random.normal(k4, (2,), jnp.float32) * 0.05
    return (w1, b1, gamma, beta, w2, b2)


def reference_forward(x, params):
    """Pure-JAX reference mirroring the PyTorch forward (training-mode BN)."""
    w1, b1, gamma, beta, w2, b2 = params
    feat = x @ w1 + b1
    mean = jnp.mean(feat, axis=0, keepdims=True)
    var = jnp.mean((feat - mean) ** 2, axis=0, keepdims=True)
    h = (feat - mean) / jnp.sqrt(var + _BN_EPS) * gamma + beta
    h = jnp.maximum(h, 0.0)
    logits = h @ w2 + b2
    out = jax.nn.log_softmax(logits, axis=1)
    return out, feat


if __name__ == "__main__":
    # DIM = 512  =>  x_dim = 64 * (512 // 2**8) = 128 ;  feature = 256
    DIM = 512
    NUM_BLOCK = 8
    FEATURE_CHN = 64
    x_dim = int(FEATURE_CHN * (DIM // 2 ** NUM_BLOCK))
    feature = _FEATURE
    constant = 1.0  # GRL constant (forward is identity)

    key = jax.random.PRNGKey(0)
    kx1, kx2, kp = jax.random.split(key, 3)
    params = make_params(kp, x_dim, feature)

    # 1) Fused single-kernel path (the common case: whole feat fits in VMEM scratch).
    x1 = jax.random.normal(kx1, (8, x_dim), jnp.float32)
    out1, feat1 = domain_classifier_forward(x1, constant, params)
    jax.block_until_ready((out1, feat1))
    out1_ref, feat1_ref = reference_forward(x1, params)
    assert out1.shape == (8, 2) and feat1.shape == (8, feature)
    assert jnp.allclose(out1, out1_ref, atol=1e-4, rtol=1e-4), "fused: log_softmax mismatch"
    assert jnp.allclose(feat1, feat1_ref, atol=1e-4, rtol=1e-4), "fused: feat mismatch"

    # 2) Two-pass fallback (parallel partial-moment K1 + folded-BN K2) with an odd
    #    batch size that exercises padding + statistic masking.
    x2 = jax.random.normal(kx2, (12, x_dim), jnp.float32)
    out2, feat2 = domain_classifier_forward(x2, constant, params, force_two_pass=True)
    jax.block_until_ready((out2, feat2))
    out2_ref, feat2_ref = reference_forward(x2, params)
    assert out2.shape == (12, 2) and feat2.shape == (12, feature)
    assert jnp.allclose(out2, out2_ref, atol=1e-4, rtol=1e-4), "two-pass: log_softmax mismatch"
    assert jnp.allclose(feat2, feat2_ref, atol=1e-4, rtol=1e-4), "two-pass: feat mismatch"

    print("KERNEL_OK")
</pallas_src>

<mosaic_0001>
module attributes {stable_mosaic.version = 11 : i64} {
  func.func @_fused_kernel(%arg0: i32, %arg1: memref<8x128xf32, #tpu.memory_space<vmem>>, %arg2: memref<128x256xf32, #tpu.memory_space<vmem>>, %arg3: memref<1x256xf32, #tpu.memory_space<vmem>>, %arg4: memref<1x256xf32, #tpu.memory_space<vmem>>, %arg5: memref<1x256xf32, #tpu.memory_space<vmem>>, %arg6: memref<1x256xf32, #tpu.memory_space<vmem>>, %arg7: memref<1xf32, #tpu.memory_space<smem>>, %arg8: memref<8x256xf32, #tpu.memory_space<vmem>>, %arg9: memref<8x2xf32, #tpu.memory_space<vmem>>, %arg10: memref<8x256xf32, #tpu.memory_space<vmem>>, %arg11: memref<1x256xf32, #tpu.memory_space<vmem>>, %arg12: memref<1x256xf32, #tpu.memory_space<vmem>>) attributes {dimension_semantics = [#tpu.dimension_semantics<arbitrary>], iteration_bounds = array<i64: 1>, scalar_prefetch = 0 : i64, scratch_operands = 3 : i64, tpu.core_type = #tpu.core_type<tc>, window_params = [{transform_indices = @transform_0, window_bounds = array<i64: 8, 128>}, {pipeline_mode = #tpu.pipeline_mode<synchronous>, transform_indices = @transform_1, window_bounds = array<i64: 128, 256>}, {pipeline_mode = #tpu.pipeline_mode<synchronous>, transform_indices = @transform_2, window_bounds = array<i64: 1, 256>}, {pipeline_mode = #tpu.pipeline_mode<synchronous>, transform_indices = @transform_3, window_bounds = array<i64: 1, 256>}, {pipeline_mode = #tpu.pipeline_mode<synchronous>, transform_indices = @transform_4, window_bounds = array<i64: 1, 256>}, {pipeline_mode = #tpu.pipeline_mode<synchronous>, transform_indices = @transform_5, window_bounds = array<i64: 1, 256>}, {transform_indices = @transform_6, window_bounds = array<i64: 1>}, {transform_indices = @transform_7, window_bounds = array<i64: 8, 256>}, {pipeline_mode = #tpu.pipeline_mode<synchronous>, transform_indices = @transform_8, window_bounds = array<i64: 8, 2>}]} {
    %c0 = arith.constant 0 : index
    %c0_0 = arith.constant 0 : index
    %0 = vector.load %arg1[%c0, %c0_0] : memref<8x128xf32, #tpu.memory_space<vmem>>, vector<8x128xf32>
    %c0_1 = arith.constant 0 : index
    %c0_2 = arith.constant 0 : index
    %1 = vector.load %arg2[%c0_1, %c0_2] : memref<128x256xf32, #tpu.memory_space<vmem>>, vector<128x256xf32>
    %cst = arith.constant dense<0.000000e+00> : vector<8x256xf32>
    %2 = tpu.matmul %0, %1, %cst {dimension_numbers = #tpu.dot_dimension_numbers<[1], [0], [0], [1], [0, 0, 1, 1], [], []>} : vector<8x128xf32>, vector<128x256xf32>, vector<8x256xf32> -> vector<8x256xf32>
    %c0_3 = arith.constant 0 : index
    %c0_4 = arith.constant 0 : index
    %3 = vector.load %arg3[%c0_3, %c0_4] : memref<1x256xf32, #tpu.memory_space<vmem>>, vector<1x256xf32>
    %4 = vector.broadcast %3 : vector<1x256xf32> to vector<8x256xf32>
    %5 = arith.addf %2, %4 : vector<8x256xf32>
    %c0_5 = arith.constant 0 : index
    %c0_6 = arith.constant 0 : index
    %6 = vector.load %arg8[%c0_5, %c0_6] : memref<8x256xf32, #tpu.memory_space<vmem>>, vector<8x256xf32>
    tpu.vector_store %arg8[%c0_5, %c0_6], %5 {strides = array<i32>} : memref<8x256xf32, #tpu.memory_space<vmem>>, vector<8x256xf32>,
    %c8_i32 = arith.constant 8 : i32
    %7 = arith.muli %arg0, %c8_i32 : i32
    %8 = tpu.assume_multiple %7, 8 : i32
    %9 = arith.index_cast %8 : i32 to index
    %c0_7 = arith.constant 0 : index
    %10 = vector.load %arg10[%9, %c0_7] : memref<8x256xf32, #tpu.memory_space<vmem>>, vector<8x256xf32>
    tpu.vector_store %arg10[%9, %c0_7], %5 {strides = array<i32>} : memref<8x256xf32, #tpu.memory_space<vmem>>, vector<8x256xf32>,
    %cst_8 = arith.constant dense<0.000000e+00> : vector<256xf32>
    %11 = vector.multi_reduction <add>, %5, %cst_8 [0] : vector<8x256xf32> to vector<256xf32>
    %12 = vector.shape_cast %11 : vector<256xf32> to vector<1x256xf32>
    %13 = arith.mulf %5, %5 : vector<8x256xf32>
    %cst_9 = arith.constant dense<0.000000e+00> : vector<256xf32>
    %14 = vector.multi_reduction <add>, %13, %cst_9 [0] : vector<8x256xf32> to vector<256xf32>
    %15 = vector.shape_cast %14 : vector<256xf32> to vector<1x256xf32>
    %c0_i32 = arith.constant 0 : i32
    %16 = arith.cmpi eq, %arg0, %c0_i32 : i32
    %17 = arith.extui %16 : i1 to i32
    %c0_i32_10 = arith.constant 0 : i32
    %18 = arith.cmpi ne, %17, %c0_i32_10 : i32
    scf.if %18 {
      %c0_15 = arith.constant 0 : index
      %c0_16 = arith.constant 0 : index
      %25 = vector.load %arg11[%c0_15, %c0_16] : memref<1x256xf32, #tpu.memory_space<vmem>>, vector<1x256xf32>
      tpu.vector_store %arg11[%c0_15, %c0_16], %12 {strides = array<i32>} : memref<1x256xf32, #tpu.memory_space<vmem>>, vector<1x256xf32>,
      %c0_17 = arith.constant 0 : index
      %c0_18 = arith.constant 0 : index
      %26 = vector.load %arg12[%c0_17, %c0_18] : memref<1x256xf32, #tpu.memory_space<vmem>>, vector<1x256xf32>
      tpu.vector_store %arg12[%c0_17, %c0_18], %15 {strides = array<i32>} : memref<1x256xf32, #tpu.memory_space<vmem>>, vector<1x256xf32>,
    } else {
    }
    %c0_i32_11 = arith.constant 0 : i32
    %19 = arith.cmpi ne, %arg0, %c0_i32_11 : i32
    %20 = arith.extui %19 : i1 to i32
    %c0_i32_12 = arith.constant 0 : i32
    %21 = arith.cmpi ne, %20, %c0_i32_12 : i32
    scf.if %21 {
      %c0_15 = arith.constant 0 : index
      %c0_16 = arith.constant 0 : index
      %25 = vector.load %arg11[%c0_15, %c0_16] : memref<1x256xf32, #tpu.memory_space<vmem>>, vector<1x256xf32>
      %26 = arith.addf %25, %12 : vector<1x256xf32>
      %c0_17 = arith.constant 0 : index
      %c0_18 = arith.constant 0 : index
      %27 = vector.load %arg11[%c0_17, %c0_18] : memref<1x256xf32, #tpu.memory_space<vmem>>, vector<1x256xf32>
      tpu.vector_store %arg11[%c0_17, %c0_18], %26 {strides = array<i32>} : memref<1x256xf32, #tpu.memory_space<vmem>>, vector<1x256xf32>,
      %c0_19 = arith.constant 0 : index
      %c0_20 = arith.constant 0 : index
      %28 = vector.load %arg12[%c0_19, %c0_20] : memref<1x256xf32, #tpu.memory_space<vmem>>, vector<1x256xf32>
      %29 = arith.addf %28, %15 : vector<1x256xf32>
      %c0_21 = arith.constant 0 : index
      %c0_22 = arith.constant 0 : index
      %30 = vector.load %arg12[%c0_21, %c0_22] : memref<1x256xf32, #tpu.memory_space<vmem>>, vector<1x256xf32>
      tpu.vector_store %arg12[%c0_21, %c0_22], %29 {strides = array<i32>} : memref<1x256xf32, #tpu.memory_space<vmem>>, vector<1x256xf32>,
    } else {
    }
    %c0_i32_13 = arith.constant 0 : i32
    %22 = arith.cmpi eq, %arg0, %c0_i32_13 : i32
    %23 = arith.extui %22 : i1 to i32
    %c0_i32_14 = arith.constant 0 : i32
    %24 = arith.cmpi ne, %23, %c0_i32_14 : i32
    scf.if %24 {
      %c0_15 = arith.constant 0 : index
      %c0_16 = arith.constant 0 : index
      %25 = vector.load %arg11[%c0_15, %c0_16] : memref<1x256xf32, #tpu.memory_space<vmem>>, vector<1x256xf32>
      %cst_17 = arith.constant 1.250000e-01 : f32
      %26 = vector.broadcast %cst_17 : f32 to vector<1x256xf32>
      %27 = arith.mulf %25, %26 : vector<1x256xf32>
      %c0_18 = arith.constant 0 : index
      %c0_19 = arith.constant 0 : index
      %28 = vector.load %arg12[%c0_18, %c0_19] : memref<1x256xf32, #tpu.memory_space<vmem>>, vector<1x256xf32>
      %cst_20 = arith.constant 1.250000e-01 : f32
      %29 = vector.broadcast %cst_20 : f32 to vector<1x256xf32>
      %30 = arith.mulf %28, %29 : vector<1x256xf32>
      %31 = arith.mulf %27, %27 : vector<1x256xf32>
      %32 = arith.subf %30, %31 : vector<1x256xf32>
      %cst_21 = arith.constant 0.000000e+00 : f32
      %33 = vector.broadcast %cst_21 : f32 to vector<1x256xf32>
      %34 = arith.maximumf %32, %33 : vector<1x256xf32>
      %cst_22 = arith.constant 9.99999974E-6 : f32
      %35 = vector.broadcast %cst_22 : f32 to vector<1x256xf32>
      %36 = arith.addf %34, %35 : vector<1x256xf32>
      %37 = math.rsqrt %36 : vector<1x256xf32>
      %c0_23 = arith.constant 0 : index
      %c0_24 = arith.constant 0 : index
      %38 = vector.load %arg4[%c0_23, %c0_24] : memref<1x256xf32, #tpu.memory_space<vmem>>, vector<1x256xf32>
      %39 = arith.mulf %37, %38 : vector<1x256xf32>
      %c0_25 = arith.constant 0 : index
      %c0_26 = arith.constant 0 : index
      %40 = vector.load %arg5[%c0_25, %c0_26] : memref<1x256xf32, #tpu.memory_space<vmem>>, vector<1x256xf32>
      %41 = arith.mulf %27, %39 : vector<1x256xf32>
      %42 = arith.subf %40, %41 : vector<1x256xf32>
      %c0_27 = arith.constant 0 : index
      %c0_28 = arith.constant 0 : index
      %43 = vector.load %arg10[%c0_27, %c0_28] : memref<8x256xf32, #tpu.memory_space<vmem>>, vector<8x256xf32>
      %44 = vector.broadcast %39 : vector<1x256xf32> to vector<8x256xf32>
      %45 = arith.mulf %43, %44 : vector<8x256xf32>
      %46 = vector.broadcast %42 : vector<1x256xf32> to vector<8x256xf32>
      %47 = arith.addf %45, %46 : vector<8x256xf32>
      %cst_29 = arith.constant 0.000000e+00 : f32
      %48 = vector.broadcast %cst_29 : f32 to vector<8x256xf32>
      %49 = arith.maximumf %47, %48 : vector<8x256xf32>
      %c0_30 = arith.constant 0 : index
      %c0_31 = arith.constant 0 : index
      %50 = vector.load %arg6[%c0_30, %c0_31] : memref<1x256xf32, #tpu.memory_space<vmem>>, vector<1x256xf32>
      %51 = vector.broadcast %50 : vector<1x256xf32> to vector<8x256xf32>
      %52 = arith.mulf %49, %51 : vector<8x256xf32>
      %cst_32 = arith.constant dense<0.000000e+00> : vector<8xf32>
      %53 = vector.multi_reduction <add>, %52, %cst_32 [1] : vector<8x256xf32> to vector<8xf32>
      %54 = vector.shape_cast %53 : vector<8xf32> to vector<8x1xf32>
      %c0_33 = arith.constant 0 : index
      %55 = memref.load %arg7[%c0_33] : memref<1xf32, #tpu.memory_space<smem>>
      %56 = vector.broadcast %55 : f32 to vector<8x1xf32>
      %57 = arith.addf %54, %56 : vector<8x1xf32>
      %cst_34 = arith.constant 0.000000e+00 : f32
      %58 = vector.broadcast %cst_34 : f32 to vector<8x1xf32>
      %59 = arith.maximumf %57, %58 : vector<8x1xf32>
      %60 = math.absf %57 : vector<8x1xf32>
      %cst_35 = arith.constant 0.000000e+00 : f32
      %61 = vector.broadcast %cst_35 : f32 to vector<8x1xf32>
      %62 = arith.subf %61, %60 : vector<8x1xf32>
      %63 = math.exp %62 : vector<8x1xf32>
      %cst_36 = arith.constant 1.000000e+00 : f32
      %64 = vector.broadcast %cst_36 : f32 to vector<8x1xf32>
      %65 = arith.addf %64, %63 : vector<8x1xf32>
      %66 = math.log %65 : vector<8x1xf32>
      %67 = arith.addf %59, %66 : vector<8x1xf32>
      %68 = arith.subf %67, %57 : vector<8x1xf32>
      %69 = tpu.iota {dimensions = array<i32: 1>} : vector<8x2xi32>
      %c0_i32_37 = arith.constant 0 : i32
      %70 = vector.broadcast %c0_i32_37 : i32 to vector<8x2xi32>
      %71 = arith.cmpi eq, %69, %70 : vector<8x2xi32>
      %cst_38 = arith.constant 0.000000e+00 : f32
      %72 = vector.broadcast %cst_38 : f32 to vector<8x1xf32>
      %73 = arith.subf %72, %67 : vector<8x1xf32>
      %cst_39 = arith.constant 0.000000e+00 : f32
      %74 = vector.broadcast %cst_39 : f32 to vector<8x1xf32>
      %75 = arith.subf %74, %68 : vector<8x1xf32>
      %76 = vector.shape_cast %73 : vector<8x1xf32> to vector<8x1xf32>
      %77 = vector.broadcast %76 : vector<8x1xf32> to vector<8x2xf32>
      %78 = vector.shape_cast %75 : vector<8x1xf32> to vector<8x1xf32>
      %79 = vector.broadcast %78 : vector<8x1xf32> to vector<8x2xf32>
      %80 = arith.select %71, %77, %79 : vector<8x2xi1>, vector<8x2xf32>
      %c0_40 = arith.constant 0 : index
      %c0_41 = arith.constant 0 : index
      %81 = vector.load %arg9[%c0_40, %c0_41] : memref<8x2xf32, #tpu.memory_space<vmem>>, vector<8x2xf32>
      tpu.vector_store %arg9[%c0_40, %c0_41], %80 {strides = array<i32>} : memref<8x2xf32, #tpu.memory_space<vmem>>, vector<8x2xf32>,
    } else {
    }
    return
  }
  func.func @transform_0(%arg0: i32) -> (i32, i32) {
    %c0_i32 = arith.constant 0 : i32
    %c0_i32_0 = arith.constant 0 : i32
    return %arg0, %c0_i32 : i32, i32
  }
  func.func @transform_1(%arg0: i32) -> (i32, i32) {
    %c0_i32 = arith.constant 0 : i32
    %c0_i32_0 = arith.constant 0 : i32
    %c0_i32_1 = arith.constant 0 : i32
    return %c0_i32, %c0_i32_0 : i32, i32
  }
  func.func @transform_2(%arg0: i32) -> (i32, i32) {
    %c0_i32 = arith.constant 0 : i32
    %c0_i32_0 = arith.constant 0 : i32
    %c0_i32_1 = arith.constant 0 : i32
    return %c0_i32, %c0_i32_0 : i32, i32
  }
  func.func @transform_3(%arg0: i32) -> (i32, i32) {
    %c0_i32 = arith.constant 0 : i32
    %c0_i32_0 = arith.constant 0 : i32
    %c0_i32_1 = arith.constant 0 : i32
    return %c0_i32, %c0_i32_0 : i32, i32
  }
  func.func @transform_4(%arg0: i32) -> (i32, i32) {
    %c0_i32 = arith.constant 0 : i32
    %c0_i32_0 = arith.constant 0 : i32
    %c0_i32_1 = arith.constant 0 : i32
    return %c0_i32, %c0_i32_0 : i32, i32
  }
  func.func @transform_5(%arg0: i32) -> (i32, i32) {
    %c0_i32 = arith.constant 0 : i32
    %c0_i32_0 = arith.constant 0 : i32
    %c0_i32_1 = arith.constant 0 : i32
    return %c0_i32, %c0_i32_0 : i32, i32
  }
  func.func @transform_6(%arg0: i32) -> i32 {
    %c0_i32 = arith.constant 0 : i32
    %c0_i32_0 = arith.constant 0 : i32
    return %c0_i32 : i32
  }
  func.func @transform_7(%arg0: i32) -> (i32, i32) {
    %c0_i32 = arith.constant 0 : i32
    %c0_i32_0 = arith.constant 0 : i32
    return %arg0, %c0_i32 : i32, i32
  }
  func.func @transform_8(%arg0: i32) -> (i32, i32) {
    %c0_i32 = arith.constant 0 : i32
    %c0_i32_0 = arith.constant 0 : i32
    %c0_i32_1 = arith.constant 0 : i32
    return %c0_i32, %c0_i32_0 : i32, i32
  }
}

</mosaic_0001>

<llo_original>
// kernel: tpu_custom_call.1
$region0: #{tpu_custom_call.1}
  #allocation0 [shape = 'u32[]', space=smem, size = 0x4, offset = 0x4, fixed_abs, tag = 'smem constant byte address 0x4 - core index']
  #allocation1 [shape = 'u32[144,128]{1,0:T(1,128)}', space=vmem, size = 0x12000, scoped, tag = 'internal scratch']
  #allocation2 [shape = 'f32[8,256]{1,0:T(8,128)}', space=vmem, size = 0x2000, scoped, tag = 'scratch operand']
  #allocation3 [shape = 'f32[1,256]{1,0:T(1,128)}', space=vmem, size = 0x400, scoped, tag = 'scratch operand']
  #allocation4 [shape = 'f32[1,256]{1,0:T(1,128)}', space=vmem, size = 0x400, scoped, tag = 'scratch operand']
  #allocation5 [shape = 'f32[1]{0:T(128)S(6)}', space=smem, size = 0x200, scoped, tag = 'scoped memory for tpu_custom_call.1']
  %s0 = inlined_call_operand.hbm [shape: f32[8,128], index: 0, kind: input, shape index: {}]
  %s1 = inlined_call_operand.hbm [shape: f32[128,256], index: 1, kind: input, shape index: {}]
  %s2 = inlined_call_operand.vmem [shape: f32[1,256], index: 2, kind: input, shape index: {}]
  %s3 = inlined_call_operand.vmem [shape: f32[1,256], index: 3, kind: input, shape index: {}]
  %s4 = inlined_call_operand.vmem [shape: f32[1,256], index: 4, kind: input, shape index: {}]
  %s5 = inlined_call_operand.vmem [shape: f32[1,256], index: 5, kind: input, shape index: {}]
  %s6 = inlined_call_operand.<no memory space> [shape: f32[1], index: 6, kind: input, shape index: {}]
  %s7 = inlined_call_operand.hbm [shape: f32[8,256], index: 7, kind: output, shape index: {0}]
  %s8 = inlined_call_operand.vmem [shape: f32[8,2], index: 8, kind: output, shape index: {1}]
  %9 = xla_tuple %s7, %s8
  %s10 = sld [smem:[#allocation0]]
  $region66: #{tpu_custom_call.1} parent=0
    _
  %s12 = ssub.s32 1, %s10
  %s13 = scalar_select 0, %s12, %s10
  %14 = sst [smem:[#allocation5]] %s6
  $region1: #{tpu_custom_call.1} parent=0
    #allocation6 [shape = 'u8[4096]{0}', space=vmem, size = 0x1000, scoped, tag = 'input window, operand 0, single buffered']
    #allocation7 [shape = 's32[1]{0}', space=sflag, size = 0x4, scoped, tag = 'scoped memory for tpu_custom_call.1']
    #allocation8 [shape = 's32[1]{0}', space=sflag, size = 0x4, scoped, tag = 'scoped memory for tpu_custom_call.1']
    #allocation9 [shape = 'u8[131072]{0}', space=vmem, size = 0x20000, scoped, tag = 'input window, operand 1, single buffered']
    #allocation10 [shape = 's32[1]{0}', space=sflag, size = 0x4, scoped, tag = 'scoped memory for tpu_custom_call.1']
    #allocation11 [shape = 'u8[8192]{0}', space=vmem, size = 0x2000, scoped, tag = 'output window, operand 0, single buffered']
    %15 = vsyncpa [#allocation7], 0
    %16 = vsyncpa [#allocation10], 0
    %17 = vsyncpa [#allocation8], 0
    // Predicated region
    $region2: #{tpu_custom_call.1} parent=1 // pred_check
      _
    $region3: #{tpu_custom_call.1} parent=1 // pred_check_branch
      %19 = sbr.rel (0) target = $region5
    $region4: #{tpu_custom_call.1} parent=1 // pred_region
      %s21 = ssub.s32 128, 128
      %22 = vsyncadd [#allocation7], %s21
      %s24 = sshll.u32 [#allocation6], 4
      %s25 = int_to_ptr.vmem [resolvable:$true] %s24
      %27 = dma.hbm_to_vmem [thread:$0]  %s0, 128, %s25, [#allocation7]
    $region5: #{tpu_custom_call.1} parent=1 // pred_fallthru
      _
    // Predicated region
    $region6: #{tpu_custom_call.1} parent=1 // pred_check
      _
    $region7: #{tpu_custom_call.1} parent=1 // pred_check_branch
      %29 = sbr.rel (0) target = $region9
    $region8: #{tpu_custom_call.1} parent=1 // pred_region
      %s31 = ssub.s32 4096, 4096
      %32 = vsyncadd [#allocation10], %s31
      %s33 = sshll.u32 [#allocation9], 4
      %s34 = int_to_ptr.vmem [resolvable:$true] %s33
      %39 = dma.hbm_to_vmem [thread:$0]  %s1, 4096, %s34, [#allocation10], 256, 256, 16
    $region9: #{tpu_custom_call.1} parent=1 // pred_fallthru
      _
    // Predicated region
    $region10: #{tpu_custom_call.1} parent=1 // pred_check
      _
    $region11: #{tpu_custom_call.1} parent=1 // pred_check_branch
      %41 = sbr.rel (0) target = $region13
    $region12: #{tpu_custom_call.1} parent=1 // pred_region
      _
    $region13: #{tpu_custom_call.1} parent=1 // pred_fallthru
      _
    // Predicated region
    $region14: #{tpu_custom_call.1} parent=1 // pred_check
      _
    $region15: #{tpu_custom_call.1} parent=1 // pred_check_branch
      %43 = sbr.rel (0) target = $region17
    $region16: #{tpu_custom_call.1} parent=1 // pred_region
      _
    $region17: #{tpu_custom_call.1} parent=1 // pred_fallthru
      _
    // Predicated region
    $region18: #{tpu_custom_call.1} parent=1 // pred_check
      _
    $region19: #{tpu_custom_call.1} parent=1 // pred_check_branch
      %45 = sbr.rel (0) target = $region21
    $region20: #{tpu_custom_call.1} parent=1 // pred_region
      _
    $region21: #{tpu_custom_call.1} parent=1 // pred_fallthru
      _
    // Predicated region
    $region22: #{tpu_custom_call.1} parent=1 // pred_check
      _
    $region23: #{tpu_custom_call.1} parent=1 // pred_check_branch
      %47 = sbr.rel (0) target = $region25
    $region24: #{tpu_custom_call.1} parent=1 // pred_region
      _
    $region25: #{tpu_custom_call.1} parent=1 // pred_fallthru
      _
    // Predicated region
    $region26: #{tpu_custom_call.1} parent=1 // pred_check
      _
    $region27: #{tpu_custom_call.1} parent=1 // pred_check_branch
      %49 = sbr.rel (0) target = $region29
    $region28: #{tpu_custom_call.1} parent=1 // pred_region
      _
    $region29: #{tpu_custom_call.1} parent=1 // pred_fallthru
      _
    // Predicated region
    $region30: #{tpu_custom_call.1} parent=1 // pred_check
      _
    $region31: #{tpu_custom_call.1} parent=1 // pred_check_branch
      %51 = sbr.rel (0) target = $region33
    $region32: #{tpu_custom_call.1} parent=1 // pred_region
      %52 = dma.done [#allocation7], 128
    $region33: #{tpu_custom_call.1} parent=1 // pred_fallthru
      _
    // Predicated region
    $region34: #{tpu_custom_call.1} parent=1 // pred_check
      _
    $region35: #{tpu_custom_call.1} parent=1 // pred_check_branch
      %54 = sbr.rel (0) target = $region37
    $region36: #{tpu_custom_call.1} parent=1 // pred_region
      %55 = dma.done [#allocation10], 4096
    $region37: #{tpu_custom_call.1} parent=1 // pred_fallthru
      _
    %v56 = vld [vmem:[#allocation6] sm:$0xff]
    %v57 = vld [vmem:[#allocation9] sm:$0xff]
    %v58 = vld [vmem:[#allocation9 + $0x8] sm:$0xff]
    %v59 = vld [vmem:[#allocation9 + $0x10] sm:$0xff]
    %v60 = vld [vmem:[#allocation9 + $0x18] sm:$0xff]
    %v61 = vld [vmem:[#allocation9 + $0x20] sm:$0xff]
    %v62 = vld [vmem:[#allocation9 + $0x28] sm:$0xff]
    %v63 = vld [vmem:[#allocation9 + $0x30] sm:$0xff]
    %v64 = vld [vmem:[#allocation9 + $0x38] sm:$0xff]
    %v65 = vld [vmem:[#allocation9 + $0x40] sm:$0xff]
    %v66 = vld [vmem:[#allocation9 + $0x48] sm:$0xff]
    %v67 = vld [vmem:[#allocation9 + $0x50] sm:$0xff]
    %v68 = vld [vmem:[#allocation9 + $0x58] sm:$0xff]
    %v69 = vld [vmem:[#allocation9 + $0x60] sm:$0xff]
    %v70 = vld [vmem:[#allocation9 + $0x68] sm:$0xff]
    %v71 = vld [vmem:[#allocation9 + $0x70] sm:$0xff]
    %v72 = vld [vmem:[#allocation9 + $0x78] sm:$0xff]
    %v73 = vld [vmem:[#allocation9 + $0x80] sm:$0xff]
    %v74 = vld [vmem:[#allocation9 + $0x88] sm:$0xff]
    %v75 = vld [vmem:[#allocation9 + $0x90] sm:$0xff]
    %v76 = vld [vmem:[#allocation9 + $0x98] sm:$0xff]
    %v77 = vld [vmem:[#allocation9 + $0xa0] sm:$0xff]
    %v78 = vld [vmem:[#allocation9 + $0xa8] sm:$0xff]
    %v79 = vld [vmem:[#allocation9 + $0xb0] sm:$0xff]
    %v80 = vld [vmem:[#allocation9 + $0xb8] sm:$0xff]
    %v81 = vld [vmem:[#allocation9 + $0xc0] sm:$0xff]
    %v82 = vld [vmem:[#allocation9 + $0xc8] sm:$0xff]
    %v83 = vld [vmem:[#allocation9 + $0xd0] sm:$0xff]
    %v84 = vld [vmem:[#allocation9 + $0xd8] sm:$0xff]
    %v85 = vld [vmem:[#allocation9 + $0xe0] sm:$0xff]
    %v86 = vld [vmem:[#allocation9 + $0xe8] sm:$0xff]
    %v87 = vld [vmem:[#allocation9 + $0xf0] sm:$0xff]
    %v88 = vld [vmem:[#allocation9 + $0xf8] sm:$0xff]
    %v89 = vld [vmem:[%s2] sm:$0x3]
    %v91 = vlaneseq
    %v92 = vshrl.u32 %v91, 7
    %v93 = vsub.s32 0, %v92
    %v94 = vrot.slane %v89, %v93
    %v95 = vlaneseq
    %v96 = vshrl.u32 %v95, 7
    %v97 = vsub.s32 1, %v96
    %v98 = vrot.slane %v89, %v97
    %101 = vmatprep.subr.mxu0 %v58
    %102 = vmatpush1.msra.mxu0 %v57
    %103 = vmatprep.subr.mxu0 %v60
    %104 = vmatpush1.msra.mxu0 %v59
    %105 = vmatprep.subr.mxu0 %v62
    %106 = vmatpush1.msra.mxu0 %v61
    %107 = vmatprep.subr.mxu0 %v64
    %108 = vmatpush1.msra.mxu0 %v63
    %109 = vmatprep.subr.mxu0 %v66
    %110 = vmatpush1.msra.mxu0 %v65
    %111 = vmatprep.subr.mxu0 %v68
    %112 = vmatpush1.msra.mxu0 %v67
    %113 = vmatprep.subr.mxu0 %v70
    %114 = vmatpush1.msra.mxu0 %v69
    %115 = vmatprep.subr.mxu0 %v72
    %116 = vmatpush1.msra.mxu0 %v71
    %117 = vmatprep.subr.mxu0 %v74
    %118 = vmatpush1.msra.mxu0 %v73
    %119 = vmatprep.subr.mxu0 %v76
    %120 = vmatpush1.msra.mxu0 %v75
    %121 = vmatprep.subr.mxu0 %v78
    %122 = vmatpush1.msra.mxu0 %v77
    %123 = vmatprep.subr.mxu0 %v80
    %124 = vmatpush1.msra.mxu0 %v79
    %125 = vmatprep.subr.mxu0 %v82
    %126 = vmatpush1.msra.mxu0 %v81
    %127 = vmatprep.subr.mxu0 %v84
    %128 = vmatpush1.msra.mxu0 %v83
    %129 = vmatprep.subr.mxu0 %v86
    %130 = vmatpush1.msra.mxu0 %v85
    %131 = vmatprep.subr.mxu0 %v88
    %132 = vmatpush1.msra.mxu0 %v87
    %133 = vmatprep.subr.mxu0 0.0
    %134 = vmatpush1.msra.mxu0 0.0
    %135 = vmatprep.subr.mxu0 0.0
    %136 = vmatpush1.msra.mxu0 0.0
    %137 = vmatprep.subr.mxu0 0.0
    %138 = vmatpush1.msra.mxu0 0.0
    %139 = vmatprep.subr.mxu0 0.0
    %140 = vmatpush1.msra.mxu0 0.0
    %141 = vmatprep.subr.mxu0 0.0
    %142 = vmatpush1.msra.mxu0 0.0
    %143 = vmatprep.subr.mxu0 0.0
    %144 = vmatpush1.msra.mxu0 0.0
    %145 = vmatprep.subr.mxu0 0.0
    %146 = vmatpush1.msra.mxu0 0.0
    %147 = vmatprep.subr.mxu0 0.0
    %148 = vmatpush1.msra.mxu0 0.0
    %149 = vmatprep.subr.mxu0 0.0
    %150 = vmatpush1.msra.mxu0 0.0
    %151 = vmatprep.subr.mxu0 0.0
    %152 = vmatpush1.msra.mxu0 0.0
    %153 = vmatprep.subr.mxu0 0.0
    %154 = vmatpush1.msra.mxu0 0.0
    %155 = vmatprep.subr.mxu0 0.0
    %156 = vmatpush1.msra.mxu0 0.0
    %157 = vmatprep.subr.mxu0 0.0
    %158 = vmatpush1.msra.mxu0 0.0
    %159 = vmatprep.subr.mxu0 0.0
    %160 = vmatpush1.msra.mxu0 0.0
    %161 = vmatprep.subr.mxu0 0.0
    %162 = vmatpush1.msra.mxu0 0.0
    %163 = vmatprep.subr.mxu0 0.0
    %164 = vmatpush1.msra.mxu0 0.0
    %165 = vmatprep.mubr.f32.mxu0 0.0
    %166 = vmatmul.mubr.f32.gmra.mrb[0].mxu0 %v56
    %v167 = vpop.f32.mrb[0].mxu0
    %v168 = vadd.f32 %v94, %v167
    %v169 = vpop.f32.mrb[0].mxu0
    %v170 = vadd.f32 %v98, %v169
    %171 = vdwg.mxu0
    %172 = vst [vmem:[#allocation11] sm:$0xff] %v168
    %173 = vst [vmem:[#allocation11 + $0x8] sm:$0xff] %v170
    %s174 = smul.u32 0, 8
    %s175 = sshra.s32 %s174, 3
    %s176 = sand.u32 %s174, 7
    %s177 = smul.u32 %s175, 2
    %s178 = smul.addr %s177, 8
    %s179 = scalar_lea.vmem [#allocation2], %s178
    %180 = vst [vmem:[%s179] sm:$0xff] %v168
    %181 = vst [vmem:[%s179 + $0x8] sm:$0xff] %v170
    %v182 = vrot.slane %v168, 4
    %v183 = vadd.f32 %v168, %v182
    %v184 = vrot.slane %v183, 2
    %v185 = vadd.f32 %v183, %v184
    %v186 = vrot.slane %v185, 1
    %v187 = vadd.f32 %v185, %v186
    %v188 = vrot.slane %v170, 4
    %v189 = vadd.f32 %v170, %v188
    %v190 = vrot.slane %v189, 2
    %v191 = vadd.f32 %v189, %v190
    %v192 = vrot.slane %v191, 1
    %v193 = vadd.f32 %v191, %v192
    %v194 = vmul.f32 %v168, %v168
    %v195 = vmul.f32 %v170, %v170
    %v196 = vrot.slane %v194, 4
    %v197 = vadd.f32 %v194, %v196
    %v198 = vrot.slane %v197, 2
    %v199 = vadd.f32 %v197, %v198
    %v200 = vrot.slane %v199, 1
    %v201 = vadd.f32 %v199, %v200
    %v202 = vrot.slane %v195, 4
    %v203 = vadd.f32 %v195, %v202
    %v204 = vrot.slane %v203, 2
    %v205 = vadd.f32 %v203, %v204
    %v206 = vrot.slane %v205, 1
    %v207 = vadd.f32 %v205, %v206
    %p208 = scmp.eq.s32.totalorder 0, 0
    // Predicated region
    $region38: #{tpu_custom_call.1} parent=1 // pred_check
      %p209 = pneg %p208
    $region39: #{tpu_custom_call.1} parent=1 // pred_check_branch
      %211 = sbr.rel (%p209) target = $region41
    $region40: #{tpu_custom_call.1} parent=1 // pred_region
      %v214 = vcombine.low %v187, %v193
      %v216 = vunpack.c.l.s4 1966171168
      %v217 = vunpack.c.0.s8 %v216
      %v218 = vlaneseq
      %v219 = vshrl.u32 %v218, 7
      %v220 = vsub.s32 %v217, %v219
      %v221 = vrot.slane %v214, %v220
      %v223 = vunpack.c.l.s4 1966171168
      %v224 = vunpack.c.0.s8 %v223
      %v225 = vlaneseq
      %v226 = vshrl.u32 %v225, 7
      %v227 = vsub.s32 %v224, %v226
      %v228 = vrot.slane %v221, %v227
      %v230 = vlaneseq
      %vm231 = vcmp.ge.s32.totalorder %v230, 0
      %vm232 = vcmp.lt.s32.totalorder %v230, 256
      %vm233 = vmand %vm231, %vm232
      %234 = vst.msk [vmem:[#allocation3] sm:$0x3] %vm233, %v228
      %v237 = vcombine.low %v201, %v207
      %v239 = vunpack.c.l.s4 1966171168
      %v240 = vunpack.c.0.s8 %v239
      %v241 = vlaneseq
      %v242 = vshrl.u32 %v241, 7
      %v243 = vsub.s32 %v240, %v242
      %v244 = vrot.slane %v237, %v243
      %v246 = vunpack.c.l.s4 1966171168
      %v247 = vunpack.c.0.s8 %v246
      %v248 = vlaneseq
      %v249 = vshrl.u32 %v248, 7
      %v250 = vsub.s32 %v247, %v249
      %v251 = vrot.slane %v244, %v250
      %253 = vst.msk [vmem:[#allocation4] sm:$0x3] %vm233, %v251
    $region41: #{tpu_custom_call.1} parent=1 // pred_fallthru
      _
    %p254 = scmp.ne.s32.totalorder 0, 0
    // Predicated region
    $region42: #{tpu_custom_call.1} parent=1 // pred_check
      %p255 = pneg %p254
    $region43: #{tpu_custom_call.1} parent=1 // pred_check_branch
      %257 = sbr.rel (%p255) target = $region45
    $region44: #{tpu_custom_call.1} parent=1 // pred_region
      %v258 = vld [vmem:[#allocation3] sm:$0x3]
      %v261 = vcombine.low %v187, %v193
      %v263 = vunpack.c.l.s4 1966171168
      %v264 = vunpack.c.0.s8 %v263
      %v265 = vlaneseq
      %v266 = vshrl.u32 %v265, 7
      %v267 = vsub.s32 %v264, %v266
      %v268 = vrot.slane %v261, %v267
      %v270 = vunpack.c.l.s4 1966171168
      %v271 = vunpack.c.0.s8 %v270
      %v272 = vlaneseq
      %v273 = vshrl.u32 %v272, 7
      %v274 = vsub.s32 %v271, %v273
      %v275 = vrot.slane %v268, %v274
      %v277 = vadd.f32 %v258, %v275
      %v278 = vlaneseq
      %vm279 = vcmp.ge.s32.totalorder %v278, 0
      %vm280 = vcmp.lt.s32.totalorder %v278, 256
      %vm281 = vmand %vm279, %vm280
      %282 = vst.msk [vmem:[#allocation3] sm:$0x3] %vm281, %v277
      %v283 = vld [vmem:[#allocation4] sm:$0x3]
      %v286 = vcombine.low %v201, %v207
      %v288 = vunpack.c.l.s4 1966171168
      %v289 = vunpack.c.0.s8 %v288
      %v290 = vlaneseq
      %v291 = vshrl.u32 %v290, 7
      %v292 = vsub.s32 %v289, %v291
      %v293 = vrot.slane %v286, %v292
      %v295 = vunpack.c.l.s4 1966171168
      %v296 = vunpack.c.0.s8 %v295
      %v297 = vlaneseq
      %v298 = vshrl.u32 %v297, 7
      %v299 = vsub.s32 %v296, %v298
      %v300 = vrot.slane %v293, %v299
      %v302 = vadd.f32 %v283, %v300
      %303 = vst.msk [vmem:[#allocation4] sm:$0x3] %vm281, %v302
    $region45: #{tpu_custom_call.1} parent=1 // pred_fallthru
      _
    // Predicated region
    $region46: #{tpu_custom_call.1} parent=1 // pred_check
      %p304 = pneg %p208
    $region47: #{tpu_custom_call.1} parent=1 // pred_check_branch
      %306 = sbr.rel (%p304) target = $region49
    $region48: #{tpu_custom_call.1} parent=1 // pred_region
      %v307 = vld [vmem:[#allocation3] sm:$0x3]
      %v308 = vmul.f32 %v307, 0.125
      %v309 = vld [vmem:[#allocation4] sm:$0x3]
      %v310 = vmul.f32 %v309, 0.125
      %v311 = vmul.f32 %v308, %v308
      %v312 = vsub.f32 %v310, %v311
      %v313 = vmax.f32 %v312, 0.0
      %v314 = vadd.f32 %v313, 1e-05
      %v315 = vrsqrt.pop %v314
      %v316 = vld [vmem:[%s3] sm:$0x3]
      %v317 = vmul.f32 %v315, %v316
      %v318 = vld [vmem:[%s4] sm:$0x3]
      %v319 = vmul.f32 %v308, %v317
      %v320 = vsub.f32 %v318, %v319
      %v321 = vld [vmem:[#allocation2] sm:$0xff]
      %v322 = vld [vmem:[#allocation2 + $0x8] sm:$0xff]
      %v324 = vlaneseq
      %v325 = vshrl.u32 %v324, 7
      %v326 = vsub.s32 0, %v325
      %v327 = vrot.slane %v317, %v326
      %v328 = vlaneseq
      %v329 = vshrl.u32 %v328, 7
      %v330 = vsub.s32 1, %v329
      %v331 = vrot.slane %v317, %v330
      %v334 = vmul.f32 %v321, %v327
      %v335 = vmul.f32 %v322, %v331
      %v337 = vlaneseq
      %v338 = vshrl.u32 %v337, 7
      %v339 = vsub.s32 0, %v338
      %v340 = vrot.slane %v320, %v339
      %v341 = vlaneseq
      %v342 = vshrl.u32 %v341, 7
      %v343 = vsub.s32 1, %v342
      %v344 = vrot.slane %v320, %v343
      %v347 = vadd.f32 %v334, %v340
      %v348 = vadd.f32 %v335, %v344
      %v349 = vmax.f32 %v347, 0.0
      %v350 = vmax.f32 %v348, 0.0
      %v351 = vld [vmem:[%s5] sm:$0x3]
      %v353 = vlaneseq
      %v354 = vshrl.u32 %v353, 7
      %v355 = vsub.s32 0, %v354
      %v356 = vrot.slane %v351, %v355
      %v357 = vlaneseq
      %v358 = vshrl.u32 %v357, 7
      %v359 = vsub.s32 1, %v358
      %v360 = vrot.slane %v351, %v359
      %v363 = vmul.f32 %v349, %v356
      %v364 = vmul.f32 %v350, %v360
      %v365 = vadd.f32 %v363, %v364
      %366 = vadd.xlane.f32.xlu0 %v365
      %v367 = vpop.xlane.xlu0 %366
      %s368 = sld [smem:[#allocation5]]
      %v369 = vstv %s368
      %v370 = vadd.f32 %v367, %v369
      %v371 = vmax.f32 %v370, 0.0
      %v372 = vand.u32 2147483647, %v370
      %v373 = vsub.f32 0.0, %v372
      %v374 = vmul.f32 %v373, 1.442695
      %v375 = vpow.pop %v374
      %v376 = vadd.f32 %v375, 1.0
      %v377 = vlog2.pop %v376
      %v378 = vmul.f32 %v377, 0.6931472
      %v379 = vadd.f32 %v371, %v378
      %v380 = vsub.f32 %v379, %v370
      %v381 = vlaneseq
      %v382 = vand.u32 %v381, 127
      %vm383 = vcmp.eq.s32.totalorder %v382, 0
      %v384 = vsub.f32 0.0, %v379
      %v385 = vsub.f32 0.0, %v380
      %v386 = vsel %vm383, %v384, %v385
      %vm387 = vcmask 15360
      %388 = vst.msk [vmem:[%s8] sm:$0xff] %vm387, %v386
    $region49: #{tpu_custom_call.1} parent=1 // pred_fallthru
      _
    // Predicated region
    $region50: #{tpu_custom_call.1} parent=1 // pred_check
      _
    $region51: #{tpu_custom_call.1} parent=1 // pred_check_branch
      %390 = sbr.rel (0) target = $region53
    $region52: #{tpu_custom_call.1} parent=1 // pred_region
      %s392 = ssub.s32 256, 256
      %393 = vsyncadd [#allocation8], %s392
      %s395 = sshll.u32 [#allocation11], 4
      %s396 = int_to_ptr.vmem [resolvable:$true] %s395
      %398 = dma.vmem_to_hbm [thread:$0]  %s396, 256, %s7, [#allocation8]
    $region53: #{tpu_custom_call.1} parent=1 // pred_fallthru
      _
    // Predicated region
    $region54: #{tpu_custom_call.1} parent=1 // pred_check
      _
    $region55: #{tpu_custom_call.1} parent=1 // pred_check_branch
      %400 = sbr.rel (0) target = $region57
    $region56: #{tpu_custom_call.1} parent=1 // pred_region
      _
    $region57: #{tpu_custom_call.1} parent=1 // pred_fallthru
      _
    // Predicated region
    $region58: #{tpu_custom_call.1} parent=1 // pred_check
      _
    $region59: #{tpu_custom_call.1} parent=1 // pred_check_branch
      %402 = sbr.rel (0) target = $region61
    $region60: #{tpu_custom_call.1} parent=1 // pred_region
      %403 = dma.done [#allocation8], 256
    $region61: #{tpu_custom_call.1} parent=1 // pred_fallthru
      _
    // Predicated region
    $region62: #{tpu_custom_call.1} parent=1 // pred_check
      _
    $region63: #{tpu_custom_call.1} parent=1 // pred_check_branch
      %405 = sbr.rel (0) target = $region65
    $region64: #{tpu_custom_call.1} parent=1 // pred_region
      _
    $region65: #{tpu_custom_call.1} parent=1 // pred_fallthru
      _
    %406 = vsyncpa [#allocation7], 1
    %407 = vsyncpa [#allocation10], 1
    %408 = vsyncpa [#allocation8], 1

</llo_original>
